<compile_context>
chip_gen: v5e
topology: v5e:2x2
jax: 0.10.0
libtpu: 0.0.40
codegen_flags: <defaults>
</compile_context>

<pallas_src>
import jax
import jax.numpy as jnp
from jax import lax
from jax.experimental import pallas as pl
from jax.experimental.pallas import tpu as pltpu

MATRIX_SIZE = 3
INPUT_SIZE = MATRIX_SIZE ** 2   # 9
HIDDEN_SIZE = 64
OUTPUT_SIZE = MATRIX_SIZE       # 3

# Default rows per grid step.  Big tiles amortize per-step pipeline overhead;
# at tb=8192 the lane-padded x/out double buffers + hidden temp are ~25 MiB.
DEFAULT_TILE_B = 8192

# Explicit scoped-VMEM budget: above v5e's 16 MiB default, below v7x's
# 64 MiB/TC physical, tiny fraction of v5e/v6e's 128 MiB.
VMEM_LIMIT_BYTES = 48 * 1024 * 1024

_PARAM_BYTES = 4 * (INPUT_SIZE * HIDDEN_SIZE + HIDDEN_SIZE
                    + HIDDEN_SIZE * OUTPUT_SIZE + OUTPUT_SIZE)


def mlp_kernel(x_ref, w1_ref, b1_ref, w2_ref, b2_ref, out_ref):
    # Layer 1: (tb, 9) @ (9, 64) -> (tb, 64), true-f32 MXU accumulate.
    h = jnp.dot(x_ref[...], w1_ref[...],
                preferred_element_type=jnp.float32,
                precision=lax.Precision.HIGHEST)
    h = jnp.maximum(h + b1_ref[...], 0.0)            # bias + ReLU
    # Layer 2 in canonical orientation: (tb, 64) @ (64, 3) -> (tb, 3).
    y = jnp.dot(h, w2_ref[...],
                preferred_element_type=jnp.float32,
                precision=lax.Precision.HIGHEST)
    out_ref[...] = (y + b2_ref[...]).astype(out_ref.dtype)


def _mlp_call(x, w1, b1, w2, b2, *, tb, n_tiles):
    rows = x.shape[0]
    return pl.pallas_call(
        mlp_kernel,
        out_shape=jax.ShapeDtypeStruct((rows, OUTPUT_SIZE), jnp.float32),
        grid=(n_tiles,),
        in_specs=[
            # x tile marches over the batch; weights/biases stay resident.
            pl.BlockSpec((tb, INPUT_SIZE), lambda i: (i, 0)),
            pl.BlockSpec((INPUT_SIZE, HIDDEN_SIZE), lambda i: (0, 0)),
            pl.BlockSpec((1, HIDDEN_SIZE), lambda i: (0, 0)),
            pl.BlockSpec((HIDDEN_SIZE, OUTPUT_SIZE), lambda i: (0, 0)),
            pl.BlockSpec((1, OUTPUT_SIZE), lambda i: (0, 0)),
        ],
        out_specs=pl.BlockSpec((tb, OUTPUT_SIZE), lambda i: (i, 0)),
        compiler_params=pltpu.CompilerParams(
            dimension_semantics=("parallel",),
            vmem_limit_bytes=VMEM_LIMIT_BYTES),
        cost_estimate=pl.CostEstimate(
            flops=2 * rows * (INPUT_SIZE * HIDDEN_SIZE
                              + HIDDEN_SIZE * OUTPUT_SIZE),
            transcendentals=0,
            bytes_accessed=rows * 4 * (INPUT_SIZE + OUTPUT_SIZE) + _PARAM_BYTES),
    )(x, w1, b1, w2, b2)


def eigenvalue_predictor(x, w1, b1, w2, b2, *, tile_b=DEFAULT_TILE_B):
    """x: (B, 9) float32. Returns (B, 3) float32 (PyTorch forward semantics)."""
    B = x.shape[0]

    if B <= tile_b:
        # Single block: block dims equal the full array dims, so any B works.
        return _mlp_call(x, w1, b1, w2, b2, tb=B, n_tiles=1)

    # Tiled path.  tb must be a multiple of 8 (sublane) since it no longer
    # equals the full batch; keep at least 2 tiles so the ("parallel",) grid
    # can be split across both TensorCores on megacore parts.
    tb = min((tile_b // 8) * 8, ((B // 2) // 8) * 8)
    tb = max(tb, 8)
    n_full = B // tb
    main_rows = n_full * tb

    # No jnp.pad: tiled call over the tile-aligned prefix, single-block call
    # over the (< tb)-row tail, then concatenate the tiny (rows, 3) outputs.
    out_main = _mlp_call(x[:main_rows], w1, b1, w2, b2, tb=tb, n_tiles=n_full)
    rem = B - main_rows
    if rem == 0:
        return out_main
    out_tail = _mlp_call(x[main_rows:], w1, b1, w2, b2, tb=rem, n_tiles=1)
    return jnp.concatenate([out_main, out_tail], axis=0)


def init_params(key):
    """Deterministic init mimicking PyTorch nn.Linear (uniform +-1/sqrt(fan_in))."""
    k1, k2, k3, k4 = jax.random.split(key, 4)
    bound1 = 1.0 / jnp.sqrt(float(INPUT_SIZE))
    bound2 = 1.0 / jnp.sqrt(float(HIDDEN_SIZE))
    # Weights stored as (in, out) — transposed relative to PyTorch's (out, in).
    w1 = jax.random.uniform(k1, (INPUT_SIZE, HIDDEN_SIZE),
                            jnp.float32, -bound1, bound1)
    b1 = jax.random.uniform(k2, (1, HIDDEN_SIZE),
                            jnp.float32, -bound1, bound1)
    w2 = jax.random.uniform(k3, (HIDDEN_SIZE, OUTPUT_SIZE),
                            jnp.float32, -bound2, bound2)
    b2 = jax.random.uniform(k4, (1, OUTPUT_SIZE),
                            jnp.float32, -bound2, bound2)
    return w1, b1, w2, b2


def reference(x, w1, b1, w2, b2):
    h = jnp.maximum(jnp.dot(x, w1, precision=lax.Precision.HIGHEST) + b1, 0.0)
    return jnp.dot(h, w2, precision=lax.Precision.HIGHEST) + b2


if __name__ == "__main__":
    key = jax.random.PRNGKey(0)
    kx, kp, kx2, kx3 = jax.random.split(key, 4)
    w1, b1, w2, b2 = init_params(kp)

    # Small batch (single-block path).
    batch = 8
    x = jax.random.normal(kx, (batch, INPUT_SIZE), jnp.float32)
    out = jax.block_until_ready(eigenvalue_predictor(x, w1, b1, w2, b2))
    assert out.shape == (batch, OUTPUT_SIZE)
    assert jnp.allclose(out, reference(x, w1, b1, w2, b2), atol=1e-5, rtol=1e-5)

    # Tiled path (forced small tile so it exercises the multi-step grid).
    batch2 = 1024
    x2 = jax.random.normal(kx2, (batch2, INPUT_SIZE), jnp.float32)
    out2 = jax.block_until_ready(
        eigenvalue_predictor(x2, w1, b1, w2, b2, tile_b=256))
    assert out2.shape == (batch2, OUTPUT_SIZE)
    assert jnp.allclose(out2, reference(x2, w1, b1, w2, b2), atol=1e-5, rtol=1e-5)

    # Ragged batch (tiled prefix + single-block tail, no padding).
    batch3 = 1000
    x3 = jax.random.normal(kx3, (batch3, INPUT_SIZE), jnp.float32)
    out3 = jax.block_until_ready(
        eigenvalue_predictor(x3, w1, b1, w2, b2, tile_b=256))
    assert out3.shape == (batch3, OUTPUT_SIZE)
    assert jnp.allclose(out3, reference(x3, w1, b1, w2, b2), atol=1e-5, rtol=1e-5)

    print("KERNEL_OK")
</pallas_src>

<mosaic_0001>
module attributes {stable_mosaic.version = 11 : i64} {
  func.func @mlp_kernel(%arg0: i32, %arg1: memref<8x9xf32, #tpu.memory_space<vmem>>, %arg2: memref<9x64xf32, #tpu.memory_space<vmem>>, %arg3: memref<1x64xf32, #tpu.memory_space<vmem>>, %arg4: memref<64x3xf32, #tpu.memory_space<vmem>>, %arg5: memref<1x3xf32, #tpu.memory_space<vmem>>, %arg6: memref<8x3xf32, #tpu.memory_space<vmem>>) attributes {dimension_semantics = [#tpu.dimension_semantics<parallel>], iteration_bounds = array<i64: 1>, scalar_prefetch = 0 : i64, scratch_operands = 0 : i64, tpu.core_type = #tpu.core_type<tc>, window_params = [{transform_indices = @transform_0, window_bounds = array<i64: 8, 9>}, {pipeline_mode = #tpu.pipeline_mode<synchronous>, transform_indices = @transform_1, window_bounds = array<i64: 9, 64>}, {pipeline_mode = #tpu.pipeline_mode<synchronous>, transform_indices = @transform_2, window_bounds = array<i64: 1, 64>}, {pipeline_mode = #tpu.pipeline_mode<synchronous>, transform_indices = @transform_3, window_bounds = array<i64: 64, 3>}, {pipeline_mode = #tpu.pipeline_mode<synchronous>, transform_indices = @transform_4, window_bounds = array<i64: 1, 3>}, {transform_indices = @transform_5, window_bounds = array<i64: 8, 3>}]} {
    %c0 = arith.constant 0 : index
    %c0_0 = arith.constant 0 : index
    %0 = vector.load %arg1[%c0, %c0_0] : memref<8x9xf32, #tpu.memory_space<vmem>>, vector<8x9xf32>
    %c0_1 = arith.constant 0 : index
    %c0_2 = arith.constant 0 : index
    %1 = vector.load %arg2[%c0_1, %c0_2] : memref<9x64xf32, #tpu.memory_space<vmem>>, vector<9x64xf32>
    %cst = arith.constant dense<0.000000e+00> : vector<8x64xf32>
    %2 = tpu.matmul %0, %1, %cst {dimension_numbers = #tpu.dot_dimension_numbers<[1], [0], [0], [1], [0, 0, 1, 1], [], []>, precision = #tpu.contract_precision<fp32>} : vector<8x9xf32>, vector<9x64xf32>, vector<8x64xf32> -> vector<8x64xf32>
    %c0_3 = arith.constant 0 : index
    %c0_4 = arith.constant 0 : index
    %3 = vector.load %arg3[%c0_3, %c0_4] : memref<1x64xf32, #tpu.memory_space<vmem>>, vector<1x64xf32>
    %4 = vector.broadcast %3 : vector<1x64xf32> to vector<8x64xf32>
    %5 = arith.addf %2, %4 : vector<8x64xf32>
    %cst_5 = arith.constant 0.000000e+00 : f32
    %6 = vector.broadcast %cst_5 : f32 to vector<8x64xf32>
    %7 = arith.maximumf %5, %6 : vector<8x64xf32>
    %c0_6 = arith.constant 0 : index
    %c0_7 = arith.constant 0 : index
    %8 = vector.load %arg4[%c0_6, %c0_7] : memref<64x3xf32, #tpu.memory_space<vmem>>, vector<64x3xf32>
    %cst_8 = arith.constant dense<0.000000e+00> : vector<8x3xf32>
    %9 = tpu.matmul %7, %8, %cst_8 {dimension_numbers = #tpu.dot_dimension_numbers<[1], [0], [0], [1], [0, 0, 1, 1], [], []>, precision = #tpu.contract_precision<fp32>} : vector<8x64xf32>, vector<64x3xf32>, vector<8x3xf32> -> vector<8x3xf32>
    %c0_9 = arith.constant 0 : index
    %c0_10 = arith.constant 0 : index
    %10 = vector.load %arg5[%c0_9, %c0_10] : memref<1x3xf32, #tpu.memory_space<vmem>>, vector<1x3xf32>
    %11 = vector.broadcast %10 : vector<1x3xf32> to vector<8x3xf32>
    %12 = arith.addf %9, %11 : vector<8x3xf32>
    %c0_11 = arith.constant 0 : index
    %c0_12 = arith.constant 0 : index
    %13 = vector.load %arg6[%c0_11, %c0_12] : memref<8x3xf32, #tpu.memory_space<vmem>>, vector<8x3xf32>
    tpu.vector_store %arg6[%c0_11, %c0_12], %12 {strides = array<i32>} : memref<8x3xf32, #tpu.memory_space<vmem>>, vector<8x3xf32>,
    return
  }
  func.func @transform_0(%arg0: i32) -> (i32, i32) {
    %c0_i32 = arith.constant 0 : i32
    %c0_i32_0 = arith.constant 0 : i32
    return %arg0, %c0_i32 : i32, i32
  }
  func.func @transform_1(%arg0: i32) -> (i32, i32) {
    %c0_i32 = arith.constant 0 : i32
    %c0_i32_0 = arith.constant 0 : i32
    %c0_i32_1 = arith.constant 0 : i32
    return %c0_i32, %c0_i32_0 : i32, i32
  }
  func.func @transform_2(%arg0: i32) -> (i32, i32) {
    %c0_i32 = arith.constant 0 : i32
    %c0_i32_0 = arith.constant 0 : i32
    %c0_i32_1 = arith.constant 0 : i32
    return %c0_i32, %c0_i32_0 : i32, i32
  }
  func.func @transform_3(%arg0: i32) -> (i32, i32) {
    %c0_i32 = arith.constant 0 : i32
    %c0_i32_0 = arith.constant 0 : i32
    %c0_i32_1 = arith.constant 0 : i32
    return %c0_i32, %c0_i32_0 : i32, i32
  }
  func.func @transform_4(%arg0: i32) -> (i32, i32) {
    %c0_i32 = arith.constant 0 : i32
    %c0_i32_0 = arith.constant 0 : i32
    %c0_i32_1 = arith.constant 0 : i32
    return %c0_i32, %c0_i32_0 : i32, i32
  }
  func.func @transform_5(%arg0: i32) -> (i32, i32) {
    %c0_i32 = arith.constant 0 : i32
    %c0_i32_0 = arith.constant 0 : i32
    return %arg0, %c0_i32 : i32, i32
  }
}

</mosaic_0001>

<llo_original>
// kernel: tpu_custom_call.1
$region0: #{tpu_custom_call.1}
  #allocation0 [shape = 'u32[]', space=smem, size = 0x4, offset = 0x4, fixed_abs, tag = 'smem constant byte address 0x4 - core index']
  #allocation1 [shape = 'u32[72,128]{1,0:T(1,128)}', space=vmem, size = 0x9000, scoped, tag = 'internal scratch']
  %s0 = inlined_call_operand.vmem [shape: f32[8,9], index: 0, kind: input, shape index: {}]
  %s1 = inlined_call_operand.vmem [shape: f32[9,64], index: 1, kind: input, shape index: {}]
  %s2 = inlined_call_operand.vmem [shape: f32[1,64], index: 2, kind: input, shape index: {}]
  %s3 = inlined_call_operand.vmem [shape: f32[64,3], index: 3, kind: input, shape index: {}]
  %s4 = inlined_call_operand.vmem [shape: f32[1,3], index: 4, kind: input, shape index: {}]
  %s5 = inlined_call_operand.vmem [shape: f32[8,3], index: 5, kind: output, shape index: {}]
  %s6 = sld [smem:[#allocation0]]
  $region30: #{tpu_custom_call.1} parent=0
    _
  %s8 = ssub.s32 1, %s6
  %s9 = scalar_select 0, %s8, %s6
  // Predicated region
  $region2: #{tpu_custom_call.1} parent=0 // pred_check
    _
  $region3: #{tpu_custom_call.1} parent=0 // pred_check_branch
    %11 = sbr.rel (0) target = $region5
  $region4: #{tpu_custom_call.1} parent=0 // pred_region
    _
  $region5: #{tpu_custom_call.1} parent=0 // pred_fallthru
    _
  // Predicated region
  $region6: #{tpu_custom_call.1} parent=0 // pred_check
    _
  $region7: #{tpu_custom_call.1} parent=0 // pred_check_branch
    %13 = sbr.rel (0) target = $region9
  $region8: #{tpu_custom_call.1} parent=0 // pred_region
    _
  $region9: #{tpu_custom_call.1} parent=0 // pred_fallthru
    _
  // Predicated region
  $region10: #{tpu_custom_call.1} parent=0 // pred_check
    _
  $region11: #{tpu_custom_call.1} parent=0 // pred_check_branch
    %15 = sbr.rel (0) target = $region13
  $region12: #{tpu_custom_call.1} parent=0 // pred_region
    _
  $region13: #{tpu_custom_call.1} parent=0 // pred_fallthru
    _
  // Predicated region
  $region14: #{tpu_custom_call.1} parent=0 // pred_check
    _
  $region15: #{tpu_custom_call.1} parent=0 // pred_check_branch
    %17 = sbr.rel (0) target = $region17
  $region16: #{tpu_custom_call.1} parent=0 // pred_region
    _
  $region17: #{tpu_custom_call.1} parent=0 // pred_fallthru
    _
  // Predicated region
  $region18: #{tpu_custom_call.1} parent=0 // pred_check
    _
  $region19: #{tpu_custom_call.1} parent=0 // pred_check_branch
    %19 = sbr.rel (0) target = $region21
  $region20: #{tpu_custom_call.1} parent=0 // pred_region
    _
  $region21: #{tpu_custom_call.1} parent=0 // pred_fallthru
    _
  %v20 = vld [vmem:[%s0] sm:$0xff]
  %v21 = vld [vmem:[%s1] sm:$0xff]
  %v22 = vld [vmem:[%s1 + $0x8] sm:$0x1]
  %v23 = vld [vmem:[%s2] sm:$0x1]
  %v25 = vperm.slane %v23, 0
  %vm27 = vcmask 72704
  %v29 = vsel %vm27, %v20, 0
  %vm31 = vcmask 1040384
  %v33 = vsel %vm31, %v22, 0
  %35 = vmatpush.msra.mxu0 0.0
  %36 = vmatpush.msra.mxu0 0.0
  %37 = vmatpush.msra.mxu0 0.0
  %38 = vmatpush.msra.mxu0 0.0
  %39 = vmatpush.msra.mxu0 0.0
  %40 = vmatpush.msra.mxu0 0.0
  %41 = vmatpush.msra.mxu0 0.0
  %42 = vmatpush.msra.mxu0 0.0
  %43 = vmatpush.msra.mxu0 0.0
  %44 = vmatpush.msra.mxu0 0.0
  %45 = vmatpush.msra.mxu0 0.0
  %46 = vmatpush.msra.mxu0 0.0
  %47 = vmatpush.msra.mxu0 0.0
  %48 = vmatpush.msra.mxu0 0.0
  %v49 = vand.u32 %v33, 4294901760
  %50 = vmatpush.msra.mxu0 %v49
  %v51 = vand.u32 %v21, 4294901760
  %52 = vmatpush.msra.mxu0 %v51
  %v53 = vand.u32 %v29, 4294901760
  %v54 = vsub.f32 %v29, %v53
  %v55 = vand.u32 %v54, 4294901760
  %v56 = vsub.f32 %v54, %v55
  %v57 = vand.u32 %v56, 4294901760
  %58 = vmatmul.f32.gmra.mxu0 %v57
  %v59 = vpop.f32.mrf.mxu0
  %v60 = vadd.f32 %v25, %v59
  %61 = vdwg.mxu0
  %62 = vmatpush.msra.mxu0 0.0
  %63 = vmatpush.msra.mxu0 0.0
  %64 = vmatpush.msra.mxu0 0.0
  %65 = vmatpush.msra.mxu0 0.0
  %66 = vmatpush.msra.mxu0 0.0
  %67 = vmatpush.msra.mxu0 0.0
  %68 = vmatpush.msra.mxu0 0.0
  %69 = vmatpush.msra.mxu0 0.0
  %70 = vmatpush.msra.mxu0 0.0
  %71 = vmatpush.msra.mxu0 0.0
  %72 = vmatpush.msra.mxu0 0.0
  %73 = vmatpush.msra.mxu0 0.0
  %74 = vmatpush.msra.mxu0 0.0
  %75 = vmatpush.msra.mxu0 0.0
  %v76 = vand.u32 %v33, 4294901760
  %v77 = vsub.f32 %v33, %v76
  %v78 = vand.u32 %v77, 4294901760
  %v79 = vsub.f32 %v77, %v78
  %v80 = vand.u32 %v79, 4294901760
  %81 = vmatpush.msra.mxu0 %v80
  %v82 = vand.u32 %v21, 4294901760
  %v83 = vsub.f32 %v21, %v82
  %v84 = vand.u32 %v83, 4294901760
  %v85 = vsub.f32 %v83, %v84
  %v86 = vand.u32 %v85, 4294901760
  %87 = vmatpush.msra.mxu0 %v86
  %v88 = vand.u32 %v29, 4294901760
  %89 = vmatmul.f32.gmra.mxu0 %v88
  %v90 = vpop.f32.mrf.mxu0
  %v91 = vadd.f32 %v60, %v90
  %92 = vdwg.mxu0
  %93 = vmatpush.msra.mxu0 0.0
  %94 = vmatpush.msra.mxu0 0.0
  %95 = vmatpush.msra.mxu0 0.0
  %96 = vmatpush.msra.mxu0 0.0
  %97 = vmatpush.msra.mxu0 0.0
  %98 = vmatpush.msra.mxu0 0.0
  %99 = vmatpush.msra.mxu0 0.0
  %100 = vmatpush.msra.mxu0 0.0
  %101 = vmatpush.msra.mxu0 0.0
  %102 = vmatpush.msra.mxu0 0.0
  %103 = vmatpush.msra.mxu0 0.0
  %104 = vmatpush.msra.mxu0 0.0
  %105 = vmatpush.msra.mxu0 0.0
  %106 = vmatpush.msra.mxu0 0.0
  %v107 = vand.u32 %v33, 4294901760
  %v108 = vsub.f32 %v33, %v107
  %109 = vmatpush.msra.mxu0 %v108
  %v110 = vand.u32 %v21, 4294901760
  %v111 = vsub.f32 %v21, %v110
  %112 = vmatpush.msra.mxu0 %v111
  %v113 = vand.u32 %v29, 4294901760
  %v114 = vsub.f32 %v29, %v113
  %115 = vmatmul.f32.gmra.mxu0 %v114
  %v116 = vpop.f32.mrf.mxu0
  %v117 = vadd.f32 %v91, %v116
  %118 = vdwg.mxu0
  %119 = vmatpush.msra.mxu0 0.0
  %120 = vmatpush.msra.mxu0 0.0
  %121 = vmatpush.msra.mxu0 0.0
  %122 = vmatpush.msra.mxu0 0.0
  %123 = vmatpush.msra.mxu0 0.0
  %124 = vmatpush.msra.mxu0 0.0
  %125 = vmatpush.msra.mxu0 0.0
  %126 = vmatpush.msra.mxu0 0.0
  %127 = vmatpush.msra.mxu0 0.0
  %128 = vmatpush.msra.mxu0 0.0
  %129 = vmatpush.msra.mxu0 0.0
  %130 = vmatpush.msra.mxu0 0.0
  %131 = vmatpush.msra.mxu0 0.0
  %132 = vmatpush.msra.mxu0 0.0
  %v133 = vand.u32 %v33, 4294901760
  %134 = vmatpush.msra.mxu0 %v133
  %v135 = vand.u32 %v21, 4294901760
  %136 = vmatpush.msra.mxu0 %v135
  %v137 = vand.u32 %v29, 4294901760
  %v138 = vsub.f32 %v29, %v137
  %v139 = vand.u32 %v138, 4294901760
  %140 = vmatmul.f32.gmra.mxu0 %v139
  %v141 = vpop.f32.mrf.mxu0
  %v142 = vadd.f32 %v117, %v141
  %143 = vdwg.mxu0
  %144 = vmatpush.msra.mxu0 0.0
  %145 = vmatpush.msra.mxu0 0.0
  %146 = vmatpush.msra.mxu0 0.0
  %147 = vmatpush.msra.mxu0 0.0
  %148 = vmatpush.msra.mxu0 0.0
  %149 = vmatpush.msra.mxu0 0.0
  %150 = vmatpush.msra.mxu0 0.0
  %151 = vmatpush.msra.mxu0 0.0
  %152 = vmatpush.msra.mxu0 0.0
  %153 = vmatpush.msra.mxu0 0.0
  %154 = vmatpush.msra.mxu0 0.0
  %155 = vmatpush.msra.mxu0 0.0
  %156 = vmatpush.msra.mxu0 0.0
  %157 = vmatpush.msra.mxu0 0.0
  %v158 = vand.u32 %v33, 4294901760
  %v159 = vsub.f32 %v33, %v158
  %v160 = vand.u32 %v159, 4294901760
  %161 = vmatpush.msra.mxu0 %v160
  %v162 = vand.u32 %v21, 4294901760
  %v163 = vsub.f32 %v21, %v162
  %v164 = vand.u32 %v163, 4294901760
  %165 = vmatpush.msra.mxu0 %v164
  %v166 = vand.u32 %v29, 4294901760
  %167 = vmatmul.f32.gmra.mxu0 %v166
  %v168 = vpop.f32.mrf.mxu0
  %v169 = vadd.f32 %v142, %v168
  %170 = vdwg.mxu0
  %171 = vmatpush.msra.mxu0 0.0
  %172 = vmatpush.msra.mxu0 0.0
  %173 = vmatpush.msra.mxu0 0.0
  %174 = vmatpush.msra.mxu0 0.0
  %175 = vmatpush.msra.mxu0 0.0
  %176 = vmatpush.msra.mxu0 0.0
  %177 = vmatpush.msra.mxu0 0.0
  %178 = vmatpush.msra.mxu0 0.0
  %179 = vmatpush.msra.mxu0 0.0
  %180 = vmatpush.msra.mxu0 0.0
  %181 = vmatpush.msra.mxu0 0.0
  %182 = vmatpush.msra.mxu0 0.0
  %183 = vmatpush.msra.mxu0 0.0
  %184 = vmatpush.msra.mxu0 0.0
  %v185 = vand.u32 %v33, 4294901760
  %186 = vmatpush.msra.mxu0 %v185
  %v187 = vand.u32 %v21, 4294901760
  %188 = vmatpush.msra.mxu0 %v187
  %v189 = vand.u32 %v29, 4294901760
  %190 = vmatmul.f32.gmra.mxu0 %v189
  %v191 = vpop.f32.mrf.mxu0
  %v192 = vadd.f32 %v169, %v191
  %193 = vdwg.mxu0
  %v194 = vmax.f32 %v192, 0.0
  %v195 = vld [vmem:[%s3] sm:$0xff]
  %v196 = vld [vmem:[%s3 + $0x8] sm:$0xff]
  %v197 = vld [vmem:[%s3 + $0x10] sm:$0xff]
  %v198 = vld [vmem:[%s3 + $0x18] sm:$0xff]
  %v199 = vld [vmem:[%s3 + $0x20] sm:$0xff]
  %v200 = vld [vmem:[%s3 + $0x28] sm:$0xff]
  %v201 = vld [vmem:[%s3 + $0x30] sm:$0xff]
  %v202 = vld [vmem:[%s3 + $0x38] sm:$0xff]
  %v203 = vld [vmem:[%s4] sm:$0x1]
  %v205 = vperm.slane %v203, 0
  %vm207 = vcmask 523264
  %v209 = vsel %vm207, %v194, 0
  %211 = vmatpush.msra.mxu0 0.0
  %212 = vmatpush.msra.mxu0 0.0
  %213 = vmatpush.msra.mxu0 0.0
  %214 = vmatpush.msra.mxu0 0.0
  %215 = vmatpush.msra.mxu0 0.0
  %216 = vmatpush.msra.mxu0 0.0
  %217 = vmatpush.msra.mxu0 0.0
  %218 = vmatpush.msra.mxu0 0.0
  %v219 = vand.u32 %v202, 4294901760
  %220 = vmatpush.msra.mxu0 %v219
  %v221 = vand.u32 %v201, 4294901760
  %222 = vmatpush.msra.mxu0 %v221
  %v223 = vand.u32 %v200, 4294901760
  %224 = vmatpush.msra.mxu0 %v223
  %v225 = vand.u32 %v199, 4294901760
  %226 = vmatpush.msra.mxu0 %v225
  %v227 = vand.u32 %v198, 4294901760
  %228 = vmatpush.msra.mxu0 %v227
  %v229 = vand.u32 %v197, 4294901760
  %230 = vmatpush.msra.mxu0 %v229
  %v231 = vand.u32 %v196, 4294901760
  %232 = vmatpush.msra.mxu0 %v231
  %v233 = vand.u32 %v195, 4294901760
  %234 = vmatpush.msra.mxu0 %v233
  %v235 = vand.u32 %v209, 4294901760
  %v236 = vsub.f32 %v209, %v235
  %v237 = vand.u32 %v236, 4294901760
  %v238 = vsub.f32 %v236, %v237
  %v239 = vand.u32 %v238, 4294901760
  %240 = vmatmul.f32.gmra.mxu0 %v239
  %v241 = vpop.f32.mrf.mxu0
  %v242 = vadd.f32 %v205, %v241
  %243 = vdwg.mxu0
  %244 = vmatpush.msra.mxu0 0.0
  %245 = vmatpush.msra.mxu0 0.0
  %246 = vmatpush.msra.mxu0 0.0
  %247 = vmatpush.msra.mxu0 0.0
  %248 = vmatpush.msra.mxu0 0.0
  %249 = vmatpush.msra.mxu0 0.0
  %250 = vmatpush.msra.mxu0 0.0
  %251 = vmatpush.msra.mxu0 0.0
  %v252 = vand.u32 %v202, 4294901760
  %v253 = vsub.f32 %v202, %v252
  %v254 = vand.u32 %v253, 4294901760
  %v255 = vsub.f32 %v253, %v254
  %v256 = vand.u32 %v255, 4294901760
  %257 = vmatpush.msra.mxu0 %v256
  %v258 = vand.u32 %v201, 4294901760
  %v259 = vsub.f32 %v201, %v258
  %v260 = vand.u32 %v259, 4294901760
  %v261 = vsub.f32 %v259, %v260
  %v262 = vand.u32 %v261, 4294901760
  %263 = vmatpush.msra.mxu0 %v262
  %v264 = vand.u32 %v200, 4294901760
  %v265 = vsub.f32 %v200, %v264
  %v266 = vand.u32 %v265, 4294901760
  %v267 = vsub.f32 %v265, %v266
  %v268 = vand.u32 %v267, 4294901760
  %269 = vmatpush.msra.mxu0 %v268
  %v270 = vand.u32 %v199, 4294901760
  %v271 = vsub.f32 %v199, %v270
  %v272 = vand.u32 %v271, 4294901760
  %v273 = vsub.f32 %v271, %v272
  %v274 = vand.u32 %v273, 4294901760
  %275 = vmatpush.msra.mxu0 %v274
  %v276 = vand.u32 %v198, 4294901760
  %v277 = vsub.f32 %v198, %v276
  %v278 = vand.u32 %v277, 4294901760
  %v279 = vsub.f32 %v277, %v278
  %v280 = vand.u32 %v279, 4294901760
  %281 = vmatpush.msra.mxu0 %v280
  %v282 = vand.u32 %v197, 4294901760
  %v283 = vsub.f32 %v197, %v282
  %v284 = vand.u32 %v283, 4294901760
  %v285 = vsub.f32 %v283, %v284
  %v286 = vand.u32 %v285, 4294901760
  %287 = vmatpush.msra.mxu0 %v286
  %v288 = vand.u32 %v196, 4294901760
  %v289 = vsub.f32 %v196, %v288
  %v290 = vand.u32 %v289, 4294901760
  %v291 = vsub.f32 %v289, %v290
  %v292 = vand.u32 %v291, 4294901760
  %293 = vmatpush.msra.mxu0 %v292
  %v294 = vand.u32 %v195, 4294901760
  %v295 = vsub.f32 %v195, %v294
  %v296 = vand.u32 %v295, 4294901760
  %v297 = vsub.f32 %v295, %v296
  %v298 = vand.u32 %v297, 4294901760
  %299 = vmatpush.msra.mxu0 %v298
  %v300 = vand.u32 %v209, 4294901760
  %301 = vmatmul.f32.gmra.mxu0 %v300
  %v302 = vpop.f32.mrf.mxu0
  %v303 = vadd.f32 %v242, %v302
  %304 = vdwg.mxu0
  %305 = vmatpush.msra.mxu0 0.0
  %306 = vmatpush.msra.mxu0 0.0
  %307 = vmatpush.msra.mxu0 0.0
  %308 = vmatpush.msra.mxu0 0.0
  %309 = vmatpush.msra.mxu0 0.0
  %310 = vmatpush.msra.mxu0 0.0
  %311 = vmatpush.msra.mxu0 0.0
  %312 = vmatpush.msra.mxu0 0.0
  %v313 = vand.u32 %v202, 4294901760
  %v314 = vsub.f32 %v202, %v313
  %315 = vmatpush.msra.mxu0 %v314
  %v316 = vand.u32 %v201, 4294901760
  %v317 = vsub.f32 %v201, %v316
  %318 = vmatpush.msra.mxu0 %v317
  %v319 = vand.u32 %v200, 4294901760
  %v320 = vsub.f32 %v200, %v319
  %321 = vmatpush.msra.mxu0 %v320
  %v322 = vand.u32 %v199, 4294901760
  %v323 = vsub.f32 %v199, %v322
  %324 = vmatpush.msra.mxu0 %v323
  %v325 = vand.u32 %v198, 4294901760
  %v326 = vsub.f32 %v198, %v325
  %327 = vmatpush.msra.mxu0 %v326
  %v328 = vand.u32 %v197, 4294901760
  %v329 = vsub.f32 %v197, %v328
  %330 = vmatpush.msra.mxu0 %v329
  %v331 = vand.u32 %v196, 4294901760
  %v332 = vsub.f32 %v196, %v331
  %333 = vmatpush.msra.mxu0 %v332
  %v334 = vand.u32 %v195, 4294901760
  %v335 = vsub.f32 %v195, %v334
  %336 = vmatpush.msra.mxu0 %v335
  %v337 = vand.u32 %v209, 4294901760
  %v338 = vsub.f32 %v209, %v337
  %339 = vmatmul.f32.gmra.mxu0 %v338
  %v340 = vpop.f32.mrf.mxu0
  %v341 = vadd.f32 %v303, %v340
  %342 = vdwg.mxu0
  %343 = vmatpush.msra.mxu0 0.0
  %344 = vmatpush.msra.mxu0 0.0
  %345 = vmatpush.msra.mxu0 0.0
  %346 = vmatpush.msra.mxu0 0.0
  %347 = vmatpush.msra.mxu0 0.0
  %348 = vmatpush.msra.mxu0 0.0
  %349 = vmatpush.msra.mxu0 0.0
  %350 = vmatpush.msra.mxu0 0.0
  %v351 = vand.u32 %v202, 4294901760
  %352 = vmatpush.msra.mxu0 %v351
  %v353 = vand.u32 %v201, 4294901760
  %354 = vmatpush.msra.mxu0 %v353
  %v355 = vand.u32 %v200, 4294901760
  %356 = vmatpush.msra.mxu0 %v355
  %v357 = vand.u32 %v199, 4294901760
  %358 = vmatpush.msra.mxu0 %v357
  %v359 = vand.u32 %v198, 4294901760
  %360 = vmatpush.msra.mxu0 %v359
  %v361 = vand.u32 %v197, 4294901760
  %362 = vmatpush.msra.mxu0 %v361
  %v363 = vand.u32 %v196, 4294901760
  %364 = vmatpush.msra.mxu0 %v363
  %v365 = vand.u32 %v195, 4294901760
  %366 = vmatpush.msra.mxu0 %v365
  %v367 = vand.u32 %v209, 4294901760
  %v368 = vsub.f32 %v209, %v367
  %v369 = vand.u32 %v368, 4294901760
  %370 = vmatmul.f32.gmra.mxu0 %v369
  %v371 = vpop.f32.mrf.mxu0
  %v372 = vadd.f32 %v341, %v371
  %373 = vdwg.mxu0
  %374 = vmatpush.msra.mxu0 0.0
  %375 = vmatpush.msra.mxu0 0.0
  %376 = vmatpush.msra.mxu0 0.0
  %377 = vmatpush.msra.mxu0 0.0
  %378 = vmatpush.msra.mxu0 0.0
  %379 = vmatpush.msra.mxu0 0.0
  %380 = vmatpush.msra.mxu0 0.0
  %381 = vmatpush.msra.mxu0 0.0
  %v382 = vand.u32 %v202, 4294901760
  %v383 = vsub.f32 %v202, %v382
  %v384 = vand.u32 %v383, 4294901760
  %385 = vmatpush.msra.mxu0 %v384
  %v386 = vand.u32 %v201, 4294901760
  %v387 = vsub.f32 %v201, %v386
  %v388 = vand.u32 %v387, 4294901760
  %389 = vmatpush.msra.mxu0 %v388
  %v390 = vand.u32 %v200, 4294901760
  %v391 = vsub.f32 %v200, %v390
  %v392 = vand.u32 %v391, 4294901760
  %393 = vmatpush.msra.mxu0 %v392
  %v394 = vand.u32 %v199, 4294901760
  %v395 = vsub.f32 %v199, %v394
  %v396 = vand.u32 %v395, 4294901760
  %397 = vmatpush.msra.mxu0 %v396
  %v398 = vand.u32 %v198, 4294901760
  %v399 = vsub.f32 %v198, %v398
  %v400 = vand.u32 %v399, 4294901760
  %401 = vmatpush.msra.mxu0 %v400
  %v402 = vand.u32 %v197, 4294901760
  %v403 = vsub.f32 %v197, %v402
  %v404 = vand.u32 %v403, 4294901760
  %405 = vmatpush.msra.mxu0 %v404
  %v406 = vand.u32 %v196, 4294901760
  %v407 = vsub.f32 %v196, %v406
  %v408 = vand.u32 %v407, 4294901760
  %409 = vmatpush.msra.mxu0 %v408
  %v410 = vand.u32 %v195, 4294901760
  %v411 = vsub.f32 %v195, %v410
  %v412 = vand.u32 %v411, 4294901760
  %413 = vmatpush.msra.mxu0 %v412
  %v414 = vand.u32 %v209, 4294901760
  %415 = vmatmul.f32.gmra.mxu0 %v414
  %v416 = vpop.f32.mrf.mxu0
  %v417 = vadd.f32 %v372, %v416
  %418 = vdwg.mxu0
  %419 = vmatpush.msra.mxu0 0.0
  %420 = vmatpush.msra.mxu0 0.0
  %421 = vmatpush.msra.mxu0 0.0
  %422 = vmatpush.msra.mxu0 0.0
  %423 = vmatpush.msra.mxu0 0.0
  %424 = vmatpush.msra.mxu0 0.0
  %425 = vmatpush.msra.mxu0 0.0
  %426 = vmatpush.msra.mxu0 0.0
  %v427 = vand.u32 %v202, 4294901760
  %428 = vmatpush.msra.mxu0 %v427
  %v429 = vand.u32 %v201, 4294901760
  %430 = vmatpush.msra.mxu0 %v429
  %v431 = vand.u32 %v200, 4294901760
  %432 = vmatpush.msra.mxu0 %v431
  %v433 = vand.u32 %v199, 4294901760
  %434 = vmatpush.msra.mxu0 %v433
  %v435 = vand.u32 %v198, 4294901760
  %436 = vmatpush.msra.mxu0 %v435
  %v437 = vand.u32 %v197, 4294901760
  %438 = vmatpush.msra.mxu0 %v437
  %v439 = vand.u32 %v196, 4294901760
  %440 = vmatpush.msra.mxu0 %v439
  %v441 = vand.u32 %v195, 4294901760
  %442 = vmatpush.msra.mxu0 %v441
  %v443 = vand.u32 %v209, 4294901760
  %444 = vmatmul.f32.gmra.mxu0 %v443
  %v445 = vpop.f32.mrf.mxu0
  %v446 = vadd.f32 %v417, %v445
  %447 = vdwg.mxu0
  %vm448 = vcmask 23552
  %449 = vst.msk [vmem:[%s5] sm:$0xff] %vm448, %v446
  // Predicated region
  $region22: #{tpu_custom_call.1} parent=0 // pred_check
    _
  $region23: #{tpu_custom_call.1} parent=0 // pred_check_branch
    %451 = sbr.rel (0) target = $region25
  $region24: #{tpu_custom_call.1} parent=0 // pred_region
    _
  $region25: #{tpu_custom_call.1} parent=0 // pred_fallthru
    _
  // Predicated region
  $region26: #{tpu_custom_call.1} parent=0 // pred_check
    _
  $region27: #{tpu_custom_call.1} parent=0 // pred_check_branch
    %453 = sbr.rel (0) target = $region29
  $region28: #{tpu_custom_call.1} parent=0 // pred_region
    _
  $region29: #{tpu_custom_call.1} parent=0 // pred_fallthru
    _

</llo_original>
